<compile_context>
chip_gen: v7x
topology: tpu7x:2x2x1
jax: 0.10.0
libtpu: 0.0.40
codegen_flags: <defaults>
</compile_context>

<pallas_src>
import jax
import jax.numpy as jnp
from jax.experimental import pallas as pl
from jax.experimental.pallas import tpu as pltpu

POOL = 4                     # AvgPool2d(4)
_MAX_NB = 8                  # max batch elements per grid step
_INPUT_VMEM_BUDGET = 32 * 1024 * 1024   # double-buffered input slab target (v7x-safe)


def _l_spa_kernel(org_ref, enh_ref, ph_ref, pw_ref, mlr_ref, mud_ref, e_ref):
    # org_ref / enh_ref : (NB, C, H, W) tile for the current batch block
    nb = org_ref.shape[0]
    hp = ph_ref.shape[0]
    wp = pw_ref.shape[1]

    # Hoist the constant-matrix loads out of the unrolled batch loop.
    ph = ph_ref[...]      # [Hp, H]   (1/(POOL*C) folded in)
    pw = pw_ref[...]      # [W,  Wp]  (1/POOL folded in)
    mlr = mlr_ref[...]    # [Wp, 2Wp] = [ml | mr]
    mud = mud_ref[...]    # [2Hp, Hp] = [mu ; md]

    for bi in range(nb):  # small static unrolled loop over the batch block
        diff = org_ref[bi].astype(jnp.float32) - enh_ref[bi].astype(jnp.float32)
        d_hw = jnp.sum(diff, axis=0)                                      # [H, W]; /C is in ph

        # 4x4 average pooling (and channel-mean scale) as two MXU matmuls.
        d = jnp.dot(
            jnp.dot(ph, d_hw, preferred_element_type=jnp.float32),
            pw,
            preferred_element_type=jnp.float32,
        )                                                                  # [Hp, Wp]

        # Fused zero-padded directional finite differences (2 matmuls for 4 directions).
        dh = jnp.dot(d, mlr, preferred_element_type=jnp.float32)          # [Hp, 2Wp]: left | right
        dv = jnp.dot(mud, d, preferred_element_type=jnp.float32)          # [2Hp, Wp]: up ; down

        dl = dh[:, :wp]
        dr = dh[:, wp:]
        du = dv[:hp, :]
        dd = dv[hp:, :]
        e_ref[bi] = (dl * dl + dr * dr + du * du + dd * dd).astype(e_ref.dtype)


def _stencil_matrices(c, h, w, pool, dtype=jnp.float32):
    hp, wp = h // pool, w // pool
    # Pooling matrices; channel-mean 1/C and pooling 1/16 folded in (1/(pool*c) * 1/pool).
    ph = (jnp.arange(h)[None, :] // pool == jnp.arange(hp)[:, None]).astype(dtype) / (pool * c)
    pw = (jnp.arange(w)[:, None] // pool == jnp.arange(wp)[None, :]).astype(dtype) / pool
    # Directional difference stencils with zero-padding boundary behaviour.
    ml = jnp.eye(wp, dtype=dtype) - jnp.eye(wp, k=1, dtype=dtype)    # right-mul: x[j] - x[j-1]
    mr = jnp.eye(wp, dtype=dtype) - jnp.eye(wp, k=-1, dtype=dtype)   # right-mul: x[j] - x[j+1]
    mu = jnp.eye(hp, dtype=dtype) - jnp.eye(hp, k=-1, dtype=dtype)   # left-mul : x[i] - x[i-1]
    md = jnp.eye(hp, dtype=dtype) - jnp.eye(hp, k=1, dtype=dtype)    # left-mul : x[i] - x[i+1]
    mlr = jnp.concatenate([ml, mr], axis=1)                          # [Wp, 2Wp]
    mud = jnp.concatenate([mu, md], axis=0)                          # [2Hp, Hp]
    return ph, pw, mlr, mud


def _pick_nb(b, c, h, w, in_itemsize):
    """Largest divisor of B (<= _MAX_NB) whose double-buffered input slab fits the budget."""
    best = 1
    for nb in range(1, min(b, _MAX_NB) + 1):
        if b % nb:
            continue
        dbuf_inputs = 2 * 2 * nb * c * h * w * in_itemsize   # org + enh, double-buffered
        if dbuf_inputs <= _INPUT_VMEM_BUDGET:
            best = nb
    return best


def _vmem_limit_bytes(nb, c, h, w, hp, wp, in_itemsize):
    dbuf_inputs = 2 * 2 * nb * c * h * w * in_itemsize
    consts = 2 * (hp * h + w * wp + wp * 2 * wp + 2 * hp * hp) * 4
    outs = 2 * nb * hp * wp * 4
    scratch = 4 * nb * h * w * 4      # headroom for f32 intermediates in the unrolled loop
    return max(int(dbuf_inputs + consts + outs + scratch + (4 << 20)), 16 << 20)


def l_spa(org, enhance):
    """Pallas TPU implementation of L_spa.forward -> E of shape [B, 1, H//4, W//4]."""
    assert org.shape == enhance.shape
    b, c, h, w = org.shape
    assert h % POOL == 0 and w % POOL == 0, "H and W must be divisible by 4"
    hp, wp = h // POOL, w // POOL

    in_itemsize = jnp.dtype(org.dtype).itemsize
    nb = _pick_nb(b, c, h, w, in_itemsize)
    ph, pw, mlr, mud = _stencil_matrices(c, h, w, POOL)

    out = pl.pallas_call(
        _l_spa_kernel,
        out_shape=jax.ShapeDtypeStruct((b, hp, wp), jnp.float32),
        grid_spec=pltpu.PrefetchScalarGridSpec(
            num_scalar_prefetch=0,
            grid=(b // nb,),
            in_specs=[
                pl.BlockSpec((nb, c, h, w), lambda i: (i, 0, 0, 0)),
                pl.BlockSpec((nb, c, h, w), lambda i: (i, 0, 0, 0)),
                pl.BlockSpec((hp, h), lambda i: (0, 0)),
                pl.BlockSpec((w, wp), lambda i: (0, 0)),
                pl.BlockSpec((wp, 2 * wp), lambda i: (0, 0)),
                pl.BlockSpec((2 * hp, hp), lambda i: (0, 0)),
            ],
            out_specs=pl.BlockSpec((nb, hp, wp), lambda i: (i, 0, 0)),
        ),
        compiler_params=pltpu.CompilerParams(
            dimension_semantics=("parallel",),
            vmem_limit_bytes=_vmem_limit_bytes(nb, c, h, w, hp, wp, in_itemsize),
        ),
    )(org, enhance, ph, pw, mlr, mud)
    return out.reshape(b, 1, hp, wp)


def _reference(org, enhance):
    """Pure-JAX mirror of the PyTorch L_spa.forward."""
    org_mean = jnp.mean(org, axis=1, keepdims=True)
    enh_mean = jnp.mean(enhance, axis=1, keepdims=True)

    def pool4(x):
        b, c, h, w = x.shape
        return x.reshape(b, c, h // POOL, POOL, w // POOL, POOL).mean(axis=(3, 5))

    op = pool4(org_mean)
    ep = pool4(enh_mean)

    def diffs(x):
        xp = jnp.pad(x, ((0, 0), (0, 0), (1, 1), (1, 1)))
        ctr = xp[:, :, 1:-1, 1:-1]
        return (
            ctr - xp[:, :, 1:-1, :-2],   # left
            ctr - xp[:, :, 1:-1, 2:],    # right
            ctr - xp[:, :, :-2, 1:-1],   # up
            ctr - xp[:, :, 2:, 1:-1],    # down
        )

    ol, orr, ou, od = diffs(op)
    el, er, eu, ed = diffs(ep)
    return (ol - el) ** 2 + (orr - er) ** 2 + (ou - eu) ** 2 + (od - ed) ** 2


if __name__ == "__main__":
    B, C, H, W = 2, 3, 16, 16

    key = jax.random.PRNGKey(0)
    k1, k2 = jax.random.split(key)
    org = jax.random.uniform(k1, (B, C, H, W), dtype=jnp.float32)
    enhance = jax.random.uniform(k2, (B, C, H, W), dtype=jnp.float32)

    e = l_spa(org, enhance)
    jax.block_until_ready(e)

    ref = _reference(org, enhance)
    assert e.shape == ref.shape, (e.shape, ref.shape)
    # rtol loosened vs 1e-4: MXU f32 matmuls may use bf16 multi-pass depending on chip.
    assert jnp.allclose(e, ref, rtol=1e-3, atol=1e-5), (e, ref)

    print("KERNEL_OK")
</pallas_src>

<mosaic_0001>
module attributes {stable_mosaic.version = 11 : i64} {
  func.func @_l_spa_kernel(%arg0: i32, %arg1: memref<2x3x16x16xf32, #tpu.memory_space<vmem>>, %arg2: memref<2x3x16x16xf32, #tpu.memory_space<vmem>>, %arg3: memref<4x16xf32, #tpu.memory_space<vmem>>, %arg4: memref<16x4xf32, #tpu.memory_space<vmem>>, %arg5: memref<4x8xf32, #tpu.memory_space<vmem>>, %arg6: memref<8x4xf32, #tpu.memory_space<vmem>>, %arg7: memref<2x4x4xf32, #tpu.memory_space<vmem>>) attributes {dimension_semantics = [#tpu.dimension_semantics<parallel>], iteration_bounds = array<i64: 1>, scalar_prefetch = 0 : i64, scratch_operands = 0 : i64, tpu.core_type = #tpu.core_type<tc>, window_params = [{transform_indices = @transform_0, window_bounds = array<i64: 2, 3, 16, 16>}, {transform_indices = @transform_1, window_bounds = array<i64: 2, 3, 16, 16>}, {pipeline_mode = #tpu.pipeline_mode<synchronous>, transform_indices = @transform_2, window_bounds = array<i64: 4, 16>}, {pipeline_mode = #tpu.pipeline_mode<synchronous>, transform_indices = @transform_3, window_bounds = array<i64: 16, 4>}, {pipeline_mode = #tpu.pipeline_mode<synchronous>, transform_indices = @transform_4, window_bounds = array<i64: 4, 8>}, {pipeline_mode = #tpu.pipeline_mode<synchronous>, transform_indices = @transform_5, window_bounds = array<i64: 8, 4>}, {transform_indices = @transform_6, window_bounds = array<i64: 2, 4, 4>}]} {
    %c0 = arith.constant 0 : index
    %c0_0 = arith.constant 0 : index
    %0 = vector.load %arg3[%c0, %c0_0] : memref<4x16xf32, #tpu.memory_space<vmem>>, vector<4x16xf32>
    %c0_1 = arith.constant 0 : index
    %c0_2 = arith.constant 0 : index
    %1 = vector.load %arg4[%c0_1, %c0_2] : memref<16x4xf32, #tpu.memory_space<vmem>>, vector<16x4xf32>
    %c0_3 = arith.constant 0 : index
    %c0_4 = arith.constant 0 : index
    %2 = vector.load %arg5[%c0_3, %c0_4] : memref<4x8xf32, #tpu.memory_space<vmem>>, vector<4x8xf32>
    %c0_5 = arith.constant 0 : index
    %c0_6 = arith.constant 0 : index
    %3 = vector.load %arg6[%c0_5, %c0_6] : memref<8x4xf32, #tpu.memory_space<vmem>>, vector<8x4xf32>
    %c0_7 = arith.constant 0 : index
    %c0_8 = arith.constant 0 : index
    %c0_9 = arith.constant 0 : index
    %c0_10 = arith.constant 0 : index
    %4 = vector.load %arg1[%c0_7, %c0_8, %c0_9, %c0_10] : memref<2x3x16x16xf32, #tpu.memory_space<vmem>>, vector<1x3x16x16xf32>
    %5 = vector.shape_cast %4 : vector<1x3x16x16xf32> to vector<3x16x16xf32>
    %c0_11 = arith.constant 0 : index
    %c0_12 = arith.constant 0 : index
    %c0_13 = arith.constant 0 : index
    %c0_14 = arith.constant 0 : index
    %6 = vector.load %arg2[%c0_11, %c0_12, %c0_13, %c0_14] : memref<2x3x16x16xf32, #tpu.memory_space<vmem>>, vector<1x3x16x16xf32>
    %7 = vector.shape_cast %6 : vector<1x3x16x16xf32> to vector<3x16x16xf32>
    %8 = arith.subf %5, %7 : vector<3x16x16xf32>
    %cst = arith.constant dense<0.000000e+00> : vector<16x16xf32>
    %9 = vector.multi_reduction <add>, %8, %cst [0] : vector<3x16x16xf32> to vector<16x16xf32>
    %cst_15 = arith.constant dense<0.000000e+00> : vector<4x16xf32>
    %10 = tpu.matmul %0, %9, %cst_15 {dimension_numbers = #tpu.dot_dimension_numbers<[1], [0], [0], [1], [0, 0, 1, 1], [], []>} : vector<4x16xf32>, vector<16x16xf32>, vector<4x16xf32> -> vector<4x16xf32>
    %cst_16 = arith.constant dense<0.000000e+00> : vector<4x4xf32>
    %11 = tpu.matmul %10, %1, %cst_16 {dimension_numbers = #tpu.dot_dimension_numbers<[1], [0], [0], [1], [0, 0, 1, 1], [], []>} : vector<4x16xf32>, vector<16x4xf32>, vector<4x4xf32> -> vector<4x4xf32>
    %cst_17 = arith.constant dense<0.000000e+00> : vector<4x8xf32>
    %12 = tpu.matmul %11, %2, %cst_17 {dimension_numbers = #tpu.dot_dimension_numbers<[1], [0], [0], [1], [0, 0, 1, 1], [], []>} : vector<4x4xf32>, vector<4x8xf32>, vector<4x8xf32> -> vector<4x8xf32>
    %cst_18 = arith.constant dense<0.000000e+00> : vector<8x4xf32>
    %13 = tpu.matmul %3, %11, %cst_18 {dimension_numbers = #tpu.dot_dimension_numbers<[1], [0], [0], [1], [0, 0, 1, 1], [], []>} : vector<8x4xf32>, vector<4x4xf32>, vector<8x4xf32> -> vector<8x4xf32>
    %14 = vector.extract_strided_slice %12 {offsets = [0, 0], sizes = [4, 4], strides = [1, 1]} : vector<4x8xf32> to vector<4x4xf32>
    %15 = vector.extract_strided_slice %12 {offsets = [0, 4], sizes = [4, 4], strides = [1, 1]} : vector<4x8xf32> to vector<4x4xf32>
    %16 = vector.extract_strided_slice %13 {offsets = [0, 0], sizes = [4, 4], strides = [1, 1]} : vector<8x4xf32> to vector<4x4xf32>
    %17 = vector.extract_strided_slice %13 {offsets = [4, 0], sizes = [4, 4], strides = [1, 1]} : vector<8x4xf32> to vector<4x4xf32>
    %18 = arith.mulf %14, %14 : vector<4x4xf32>
    %19 = arith.mulf %15, %15 : vector<4x4xf32>
    %20 = arith.addf %18, %19 : vector<4x4xf32>
    %21 = arith.mulf %16, %16 : vector<4x4xf32>
    %22 = arith.addf %20, %21 : vector<4x4xf32>
    %23 = arith.mulf %17, %17 : vector<4x4xf32>
    %24 = arith.addf %22, %23 : vector<4x4xf32>
    %c0_19 = arith.constant 0 : index
    %c0_20 = arith.constant 0 : index
    %c0_21 = arith.constant 0 : index
    %25 = vector.load %arg7[%c0_19, %c0_20, %c0_21] : memref<2x4x4xf32, #tpu.memory_space<vmem>>, vector<1x4x4xf32>
    %26 = vector.shape_cast %25 : vector<1x4x4xf32> to vector<4x4xf32>
    %27 = vector.shape_cast %24 : vector<4x4xf32> to vector<1x4x4xf32>
    tpu.vector_store %arg7[%c0_19, %c0_20, %c0_21], %27 {strides = array<i32>} : memref<2x4x4xf32, #tpu.memory_space<vmem>>, vector<1x4x4xf32>,
    %c1 = arith.constant 1 : index
    %c0_22 = arith.constant 0 : index
    %c0_23 = arith.constant 0 : index
    %c0_24 = arith.constant 0 : index
    %28 = vector.load %arg1[%c1, %c0_22, %c0_23, %c0_24] : memref<2x3x16x16xf32, #tpu.memory_space<vmem>>, vector<1x3x16x16xf32>
    %29 = vector.shape_cast %28 : vector<1x3x16x16xf32> to vector<3x16x16xf32>
    %c1_25 = arith.constant 1 : index
    %c0_26 = arith.constant 0 : index
    %c0_27 = arith.constant 0 : index
    %c0_28 = arith.constant 0 : index
    %30 = vector.load %arg2[%c1_25, %c0_26, %c0_27, %c0_28] : memref<2x3x16x16xf32, #tpu.memory_space<vmem>>, vector<1x3x16x16xf32>
    %31 = vector.shape_cast %30 : vector<1x3x16x16xf32> to vector<3x16x16xf32>
    %32 = arith.subf %29, %31 : vector<3x16x16xf32>
    %cst_29 = arith.constant dense<0.000000e+00> : vector<16x16xf32>
    %33 = vector.multi_reduction <add>, %32, %cst_29 [0] : vector<3x16x16xf32> to vector<16x16xf32>
    %cst_30 = arith.constant dense<0.000000e+00> : vector<4x16xf32>
    %34 = tpu.matmul %0, %33, %cst_30 {dimension_numbers = #tpu.dot_dimension_numbers<[1], [0], [0], [1], [0, 0, 1, 1], [], []>} : vector<4x16xf32>, vector<16x16xf32>, vector<4x16xf32> -> vector<4x16xf32>
    %cst_31 = arith.constant dense<0.000000e+00> : vector<4x4xf32>
    %35 = tpu.matmul %34, %1, %cst_31 {dimension_numbers = #tpu.dot_dimension_numbers<[1], [0], [0], [1], [0, 0, 1, 1], [], []>} : vector<4x16xf32>, vector<16x4xf32>, vector<4x4xf32> -> vector<4x4xf32>
    %cst_32 = arith.constant dense<0.000000e+00> : vector<4x8xf32>
    %36 = tpu.matmul %35, %2, %cst_32 {dimension_numbers = #tpu.dot_dimension_numbers<[1], [0], [0], [1], [0, 0, 1, 1], [], []>} : vector<4x4xf32>, vector<4x8xf32>, vector<4x8xf32> -> vector<4x8xf32>
    %cst_33 = arith.constant dense<0.000000e+00> : vector<8x4xf32>
    %37 = tpu.matmul %3, %35, %cst_33 {dimension_numbers = #tpu.dot_dimension_numbers<[1], [0], [0], [1], [0, 0, 1, 1], [], []>} : vector<8x4xf32>, vector<4x4xf32>, vector<8x4xf32> -> vector<8x4xf32>
    %38 = vector.extract_strided_slice %36 {offsets = [0, 0], sizes = [4, 4], strides = [1, 1]} : vector<4x8xf32> to vector<4x4xf32>
    %39 = vector.extract_strided_slice %36 {offsets = [0, 4], sizes = [4, 4], strides = [1, 1]} : vector<4x8xf32> to vector<4x4xf32>
    %40 = vector.extract_strided_slice %37 {offsets = [0, 0], sizes = [4, 4], strides = [1, 1]} : vector<8x4xf32> to vector<4x4xf32>
    %41 = vector.extract_strided_slice %37 {offsets = [4, 0], sizes = [4, 4], strides = [1, 1]} : vector<8x4xf32> to vector<4x4xf32>
    %42 = arith.mulf %38, %38 : vector<4x4xf32>
    %43 = arith.mulf %39, %39 : vector<4x4xf32>
    %44 = arith.addf %42, %43 : vector<4x4xf32>
    %45 = arith.mulf %40, %40 : vector<4x4xf32>
    %46 = arith.addf %44, %45 : vector<4x4xf32>
    %47 = arith.mulf %41, %41 : vector<4x4xf32>
    %48 = arith.addf %46, %47 : vector<4x4xf32>
    %c1_34 = arith.constant 1 : index
    %c0_35 = arith.constant 0 : index
    %c0_36 = arith.constant 0 : index
    %49 = vector.load %arg7[%c1_34, %c0_35, %c0_36] : memref<2x4x4xf32, #tpu.memory_space<vmem>>, vector<1x4x4xf32>
    %50 = vector.shape_cast %49 : vector<1x4x4xf32> to vector<4x4xf32>
    %51 = vector.shape_cast %48 : vector<4x4xf32> to vector<1x4x4xf32>
    tpu.vector_store %arg7[%c1_34, %c0_35, %c0_36], %51 {strides = array<i32>} : memref<2x4x4xf32, #tpu.memory_space<vmem>>, vector<1x4x4xf32>,
    return
  }
  func.func @transform_0(%arg0: i32) -> (i32, i32, i32, i32) {
    %c0_i32 = arith.constant 0 : i32
    %c0_i32_0 = arith.constant 0 : i32
    %c0_i32_1 = arith.constant 0 : i32
    %c0_i32_2 = arith.constant 0 : i32
    return %arg0, %c0_i32, %c0_i32_0, %c0_i32_1 : i32, i32, i32, i32
  }
  func.func @transform_1(%arg0: i32) -> (i32, i32, i32, i32) {
    %c0_i32 = arith.constant 0 : i32
    %c0_i32_0 = arith.constant 0 : i32
    %c0_i32_1 = arith.constant 0 : i32
    %c0_i32_2 = arith.constant 0 : i32
    return %arg0, %c0_i32, %c0_i32_0, %c0_i32_1 : i32, i32, i32, i32
  }
  func.func @transform_2(%arg0: i32) -> (i32, i32) {
    %c0_i32 = arith.constant 0 : i32
    %c0_i32_0 = arith.constant 0 : i32
    %c0_i32_1 = arith.constant 0 : i32
    return %c0_i32, %c0_i32_0 : i32, i32
  }
  func.func @transform_3(%arg0: i32) -> (i32, i32) {
    %c0_i32 = arith.constant 0 : i32
    %c0_i32_0 = arith.constant 0 : i32
    %c0_i32_1 = arith.constant 0 : i32
    return %c0_i32, %c0_i32_0 : i32, i32
  }
  func.func @transform_4(%arg0: i32) -> (i32, i32) {
    %c0_i32 = arith.constant 0 : i32
    %c0_i32_0 = arith.constant 0 : i32
    %c0_i32_1 = arith.constant 0 : i32
    return %c0_i32, %c0_i32_0 : i32, i32
  }
  func.func @transform_5(%arg0: i32) -> (i32, i32) {
    %c0_i32 = arith.constant 0 : i32
    %c0_i32_0 = arith.constant 0 : i32
    %c0_i32_1 = arith.constant 0 : i32
    return %c0_i32, %c0_i32_0 : i32, i32
  }
  func.func @transform_6(%arg0: i32) -> (i32, i32, i32) {
    %c0_i32 = arith.constant 0 : i32
    %c0_i32_0 = arith.constant 0 : i32
    %c0_i32_1 = arith.constant 0 : i32
    return %arg0, %c0_i32, %c0_i32_0 : i32, i32, i32
  }
}

</mosaic_0001>

<llo_original>
// kernel: tpu_custom_call.1
$region0: #{tpu_custom_call.1}
  #allocation0 [shape = 'u32[]', space=smem, size = 0x4, offset = 0x4, fixed_abs, tag = 'smem constant byte address 0x4 - core index']
  #allocation1 [shape = 'u32[144,128]{1,0:T(1,128)}', space=vmem, size = 0x12000, scoped, tag = 'internal scratch']
  %s0 = inlined_call_operand.hbm [shape: f32[2,3,16,16], index: 0, kind: input, shape index: {}]
  %s1 = inlined_call_operand.hbm [shape: f32[2,3,16,16], index: 1, kind: input, shape index: {}]
  %s2 = inlined_call_operand.vmem [shape: f32[4,16], index: 2, kind: input, shape index: {}]
  %s3 = inlined_call_operand.vmem [shape: f32[16,4], index: 3, kind: input, shape index: {}]
  %s4 = inlined_call_operand.vmem [shape: f32[4,8], index: 4, kind: input, shape index: {}]
  %s5 = inlined_call_operand.vmem [shape: f32[8,4], index: 5, kind: input, shape index: {}]
  %s6 = inlined_call_operand.hbm [shape: f32[2,4,4], index: 6, kind: output, shape index: {}]
  %s7 = sld [smem:[#allocation0]]
  $region42: #{tpu_custom_call.1} parent=0
    _
  %s9 = ssub.s32 1, %s7
  %s10 = scalar_select 0, %s9, %s7
  $region1: #{tpu_custom_call.1} parent=0
    #allocation2 [shape = 'u8[49152]{0}', space=vmem, size = 0xc000, scoped, tag = 'input window, operand 0, single buffered']
    #allocation3 [shape = 's32[1]{0}', space=sflag, size = 0x4, scoped, tag = 'scoped memory for tpu_custom_call.1']
    #allocation4 [shape = 's32[1]{0}', space=sflag, size = 0x4, scoped, tag = 'scoped memory for tpu_custom_call.1']
    #allocation5 [shape = 'u8[49152]{0}', space=vmem, size = 0xc000, scoped, tag = 'input window, operand 1, single buffered']
    #allocation6 [shape = 's32[1]{0}', space=sflag, size = 0x4, scoped, tag = 'scoped memory for tpu_custom_call.1']
    #allocation7 [shape = 'u8[4096]{0}', space=vmem, size = 0x1000, scoped, tag = 'output window, operand 0, single buffered']
    %11 = vsyncpa [#allocation3], 0
    %12 = vsyncpa [#allocation6], 0
    %13 = vsyncpa [#allocation4], 0
    // Predicated region
    $region2: #{tpu_custom_call.1} parent=1 // pred_check
      _
    $region3: #{tpu_custom_call.1} parent=1 // pred_check_branch
      %15 = sbr.rel (0) target = $region5
    $region4: #{tpu_custom_call.1} parent=1 // pred_region
      %s17 = ssub.s32 1536, 1536
      %18 = vsyncadd [#allocation3], %s17
      %s19 = sshll.u32 [#allocation2], 4
      %s20 = int_to_ptr.vmem [resolvable:$true] %s19
      %25 = dma.hbm_to_vmem [thread:$0]  %s0, 1536, %s20, [#allocation3], 128, 128, 8
    $region5: #{tpu_custom_call.1} parent=1 // pred_fallthru
      _
    // Predicated region
    $region6: #{tpu_custom_call.1} parent=1 // pred_check
      _
    $region7: #{tpu_custom_call.1} parent=1 // pred_check_branch
      %27 = sbr.rel (0) target = $region9
    $region8: #{tpu_custom_call.1} parent=1 // pred_region
      %s29 = ssub.s32 1536, 1536
      %30 = vsyncadd [#allocation6], %s29
      %s31 = sshll.u32 [#allocation5], 4
      %s32 = int_to_ptr.vmem [resolvable:$true] %s31
      %37 = dma.hbm_to_vmem [thread:$0]  %s1, 1536, %s32, [#allocation6], 128, 128, 8
    $region9: #{tpu_custom_call.1} parent=1 // pred_fallthru
      _
    // Predicated region
    $region10: #{tpu_custom_call.1} parent=1 // pred_check
      _
    $region11: #{tpu_custom_call.1} parent=1 // pred_check_branch
      %39 = sbr.rel (0) target = $region13
    $region12: #{tpu_custom_call.1} parent=1 // pred_region
      _
    $region13: #{tpu_custom_call.1} parent=1 // pred_fallthru
      _
    // Predicated region
    $region14: #{tpu_custom_call.1} parent=1 // pred_check
      _
    $region15: #{tpu_custom_call.1} parent=1 // pred_check_branch
      %41 = sbr.rel (0) target = $region17
    $region16: #{tpu_custom_call.1} parent=1 // pred_region
      _
    $region17: #{tpu_custom_call.1} parent=1 // pred_fallthru
      _
    // Predicated region
    $region18: #{tpu_custom_call.1} parent=1 // pred_check
      _
    $region19: #{tpu_custom_call.1} parent=1 // pred_check_branch
      %43 = sbr.rel (0) target = $region21
    $region20: #{tpu_custom_call.1} parent=1 // pred_region
      _
    $region21: #{tpu_custom_call.1} parent=1 // pred_fallthru
      _
    // Predicated region
    $region22: #{tpu_custom_call.1} parent=1 // pred_check
      _
    $region23: #{tpu_custom_call.1} parent=1 // pred_check_branch
      %45 = sbr.rel (0) target = $region25
    $region24: #{tpu_custom_call.1} parent=1 // pred_region
      _
    $region25: #{tpu_custom_call.1} parent=1 // pred_fallthru
      _
    // Predicated region
    $region26: #{tpu_custom_call.1} parent=1 // pred_check
      _
    $region27: #{tpu_custom_call.1} parent=1 // pred_check_branch
      %47 = sbr.rel (0) target = $region29
    $region28: #{tpu_custom_call.1} parent=1 // pred_region
      %48 = dma.done [#allocation3], 1536
    $region29: #{tpu_custom_call.1} parent=1 // pred_fallthru
      _
    // Predicated region
    $region30: #{tpu_custom_call.1} parent=1 // pred_check
      _
    $region31: #{tpu_custom_call.1} parent=1 // pred_check_branch
      %50 = sbr.rel (0) target = $region33
    $region32: #{tpu_custom_call.1} parent=1 // pred_region
      %51 = dma.done [#allocation6], 1536
    $region33: #{tpu_custom_call.1} parent=1 // pred_fallthru
      _
    %v52 = vld [vmem:[%s2] sm:$0xf]
    %v53 = vld [vmem:[%s3] sm:$0xff]
    %v54 = vld [vmem:[%s3 + $0x8] sm:$0xff]
    %v55 = vld [vmem:[%s4] sm:$0xf]
    %v56 = vld [vmem:[%s5] sm:$0xff]
    %v57 = vld [vmem:[#allocation2] sm:$0xff]
    %v58 = vld [vmem:[#allocation2 + $0x8] sm:$0xff]
    %v59 = vld [vmem:[#allocation2 + $0x10] sm:$0xff]
    %v60 = vld [vmem:[#allocation2 + $0x18] sm:$0xff]
    %v61 = vld [vmem:[#allocation2 + $0x20] sm:$0xff]
    %v62 = vld [vmem:[#allocation2 + $0x28] sm:$0xff]
    %v63 = vld [vmem:[#allocation5] sm:$0xff]
    %v64 = vld [vmem:[#allocation5 + $0x8] sm:$0xff]
    %v65 = vld [vmem:[#allocation5 + $0x10] sm:$0xff]
    %v66 = vld [vmem:[#allocation5 + $0x18] sm:$0xff]
    %v67 = vld [vmem:[#allocation5 + $0x20] sm:$0xff]
    %v68 = vld [vmem:[#allocation5 + $0x28] sm:$0xff]
    %v69 = vsub.f32 %v57, %v63
    %v70 = vsub.f32 %v58, %v64
    %v71 = vsub.f32 %v59, %v65
    %v72 = vsub.f32 %v60, %v66
    %v73 = vsub.f32 %v61, %v67
    %v74 = vsub.f32 %v62, %v68
    %vm75 = vcmask 130048
    %v76 = vsel %vm75, %v69, 0.0
    %v77 = vsel %vm75, %v71, 0.0
    %v78 = vadd.f32 %v76, %v77
    %v79 = vsel %vm75, %v73, 0.0
    %v80 = vadd.f32 %v78, %v79
    %v81 = vsel %vm75, %v70, 0.0
    %v82 = vsel %vm75, %v72, 0.0
    %v83 = vadd.f32 %v81, %v82
    %v84 = vsel %vm75, %v74, 0.0
    %v85 = vadd.f32 %v83, %v84
    %v87 = vsel %vm75, %v52, 0
    %89 = vmatprep.subr.mxu0 0.0
    %90 = vmatpush1.msra.mxu0 %v80
    %91 = vmatprep.subr.mxu0 0.0
    %92 = vmatpush1.msra.mxu0 %v85
    %93 = vmatprep.subr.mxu0 0.0
    %94 = vmatpush1.msra.mxu0 0.0
    %95 = vmatprep.subr.mxu0 0.0
    %96 = vmatpush1.msra.mxu0 0.0
    %97 = vmatprep.subr.mxu0 0.0
    %98 = vmatpush1.msra.mxu0 0.0
    %99 = vmatprep.subr.mxu0 0.0
    %100 = vmatpush1.msra.mxu0 0.0
    %101 = vmatprep.subr.mxu0 0.0
    %102 = vmatpush1.msra.mxu0 0.0
    %103 = vmatprep.subr.mxu0 0.0
    %104 = vmatpush1.msra.mxu0 0.0
    %105 = vmatprep.subr.mxu0 0.0
    %106 = vmatpush1.msra.mxu0 0.0
    %107 = vmatprep.subr.mxu0 0.0
    %108 = vmatpush1.msra.mxu0 0.0
    %109 = vmatprep.subr.mxu0 0.0
    %110 = vmatpush1.msra.mxu0 0.0
    %111 = vmatprep.subr.mxu0 0.0
    %112 = vmatpush1.msra.mxu0 0.0
    %113 = vmatprep.subr.mxu0 0.0
    %114 = vmatpush1.msra.mxu0 0.0
    %115 = vmatprep.subr.mxu0 0.0
    %116 = vmatpush1.msra.mxu0 0.0
    %117 = vmatprep.subr.mxu0 0.0
    %118 = vmatpush1.msra.mxu0 0.0
    %119 = vmatprep.subr.mxu0 0.0
    %120 = vmatpush1.msra.mxu0 0.0
    %121 = vmatprep.subr.mxu0 0.0
    %122 = vmatpush1.msra.mxu0 0.0
    %123 = vmatprep.subr.mxu0 0.0
    %124 = vmatpush1.msra.mxu0 0.0
    %125 = vmatprep.subr.mxu0 0.0
    %126 = vmatpush1.msra.mxu0 0.0
    %127 = vmatprep.subr.mxu0 0.0
    %128 = vmatpush1.msra.mxu0 0.0
    %129 = vmatprep.subr.mxu0 0.0
    %130 = vmatpush1.msra.mxu0 0.0
    %131 = vmatprep.subr.mxu0 0.0
    %132 = vmatpush1.msra.mxu0 0.0
    %133 = vmatprep.subr.mxu0 0.0
    %134 = vmatpush1.msra.mxu0 0.0
    %135 = vmatprep.subr.mxu0 0.0
    %136 = vmatpush1.msra.mxu0 0.0
    %137 = vmatprep.subr.mxu0 0.0
    %138 = vmatpush1.msra.mxu0 0.0
    %139 = vmatprep.subr.mxu0 0.0
    %140 = vmatpush1.msra.mxu0 0.0
    %141 = vmatprep.subr.mxu0 0.0
    %142 = vmatpush1.msra.mxu0 0.0
    %143 = vmatprep.subr.mxu0 0.0
    %144 = vmatpush1.msra.mxu0 0.0
    %145 = vmatprep.subr.mxu0 0.0
    %146 = vmatpush1.msra.mxu0 0.0
    %147 = vmatprep.subr.mxu0 0.0
    %148 = vmatpush1.msra.mxu0 0.0
    %149 = vmatprep.subr.mxu0 0.0
    %150 = vmatpush1.msra.mxu0 0.0
    %151 = vmatprep.subr.mxu0 0.0
    %152 = vmatpush1.msra.mxu0 0.0
    %153 = vmatprep.mubr.f32.mxu0 0.0
    %154 = vmatmul.mubr.f32.gmra.mrb[0].mxu0 %v87
    %v155 = vpop.f32.mrb[0].mxu0
    %v156 = vadd.f32 0.0, %v155
    %v157 = vpop.f32.mrb[0].mxu0
    %158 = vdwg.mxu0
    %v160 = vsel %vm75, %v156, 0
    %162 = vmatprep.subr.mxu0 0.0
    %163 = vmatpush1.msra.mxu0 %v53
    %164 = vmatprep.subr.mxu0 0.0
    %165 = vmatpush1.msra.mxu0 %v54
    %166 = vmatprep.subr.mxu0 0.0
    %167 = vmatpush1.msra.mxu0 0.0
    %168 = vmatprep.subr.mxu0 0.0
    %169 = vmatpush1.msra.mxu0 0.0
    %170 = vmatprep.subr.mxu0 0.0
    %171 = vmatpush1.msra.mxu0 0.0
    %172 = vmatprep.subr.mxu0 0.0
    %173 = vmatpush1.msra.mxu0 0.0
    %174 = vmatprep.subr.mxu0 0.0
    %175 = vmatpush1.msra.mxu0 0.0
    %176 = vmatprep.subr.mxu0 0.0
    %177 = vmatpush1.msra.mxu0 0.0
    %178 = vmatprep.subr.mxu0 0.0
    %179 = vmatpush1.msra.mxu0 0.0
    %180 = vmatprep.subr.mxu0 0.0
    %181 = vmatpush1.msra.mxu0 0.0
    %182 = vmatprep.subr.mxu0 0.0
    %183 = vmatpush1.msra.mxu0 0.0
    %184 = vmatprep.subr.mxu0 0.0
    %185 = vmatpush1.msra.mxu0 0.0
    %186 = vmatprep.subr.mxu0 0.0
    %187 = vmatpush1.msra.mxu0 0.0
    %188 = vmatprep.subr.mxu0 0.0
    %189 = vmatpush1.msra.mxu0 0.0
    %190 = vmatprep.subr.mxu0 0.0
    %191 = vmatpush1.msra.mxu0 0.0
    %192 = vmatprep.subr.mxu0 0.0
    %193 = vmatpush1.msra.mxu0 0.0
    %194 = vmatprep.subr.mxu0 0.0
    %195 = vmatpush1.msra.mxu0 0.0
    %196 = vmatprep.subr.mxu0 0.0
    %197 = vmatpush1.msra.mxu0 0.0
    %198 = vmatprep.subr.mxu0 0.0
    %199 = vmatpush1.msra.mxu0 0.0
    %200 = vmatprep.subr.mxu0 0.0
    %201 = vmatpush1.msra.mxu0 0.0
    %202 = vmatprep.subr.mxu0 0.0
    %203 = vmatpush1.msra.mxu0 0.0
    %204 = vmatprep.subr.mxu0 0.0
    %205 = vmatpush1.msra.mxu0 0.0
    %206 = vmatprep.subr.mxu0 0.0
    %207 = vmatpush1.msra.mxu0 0.0
    %208 = vmatprep.subr.mxu0 0.0
    %209 = vmatpush1.msra.mxu0 0.0
    %210 = vmatprep.subr.mxu0 0.0
    %211 = vmatpush1.msra.mxu0 0.0
    %212 = vmatprep.subr.mxu0 0.0
    %213 = vmatpush1.msra.mxu0 0.0
    %214 = vmatprep.subr.mxu0 0.0
    %215 = vmatpush1.msra.mxu0 0.0
    %216 = vmatprep.subr.mxu0 0.0
    %217 = vmatpush1.msra.mxu0 0.0
    %218 = vmatprep.subr.mxu0 0.0
    %219 = vmatpush1.msra.mxu0 0.0
    %220 = vmatprep.subr.mxu0 0.0
    %221 = vmatpush1.msra.mxu0 0.0
    %222 = vmatprep.subr.mxu0 0.0
    %223 = vmatpush1.msra.mxu0 0.0
    %224 = vmatprep.subr.mxu0 0.0
    %225 = vmatpush1.msra.mxu0 0.0
    %226 = vmatprep.mubr.f32.mxu0 0.0
    %227 = vmatmul.mubr.f32.gmra.mrb[0].mxu0 %v160
    %v228 = vpop.f32.mrb[0].mxu0
    %v229 = vadd.f32 0.0, %v228
    %v230 = vpop.f32.mrb[0].mxu0
    %231 = vdwg.mxu0
    %vm232 = vcmask 31744
    %v234 = vsel %vm232, %v229, 0
    %vm236 = vcmask 1043456
    %v238 = vsel %vm236, %v55, 0
    %240 = vmatprep.subr.mxu0 0.0
    %241 = vmatpush1.msra.mxu0 %v238
    %242 = vmatprep.subr.mxu0 0.0
    %243 = vmatpush1.msra.mxu0 0.0
    %244 = vmatprep.subr.mxu0 0.0
    %245 = vmatpush1.msra.mxu0 0.0
    %246 = vmatprep.subr.mxu0 0.0
    %247 = vmatpush1.msra.mxu0 0.0
    %248 = vmatprep.subr.mxu0 0.0
    %249 = vmatpush1.msra.mxu0 0.0
    %250 = vmatprep.subr.mxu0 0.0
    %251 = vmatpush1.msra.mxu0 0.0
    %252 = vmatprep.subr.mxu0 0.0
    %253 = vmatpush1.msra.mxu0 0.0
    %254 = vmatprep.subr.mxu0 0.0
    %255 = vmatpush1.msra.mxu0 0.0
    %256 = vmatprep.subr.mxu0 0.0
    %257 = vmatpush1.msra.mxu0 0.0
    %258 = vmatprep.subr.mxu0 0.0
    %259 = vmatpush1.msra.mxu0 0.0
    %260 = vmatprep.subr.mxu0 0.0
    %261 = vmatpush1.msra.mxu0 0.0
    %262 = vmatprep.subr.mxu0 0.0
    %263 = vmatpush1.msra.mxu0 0.0
    %264 = vmatprep.subr.mxu0 0.0
    %265 = vmatpush1.msra.mxu0 0.0
    %266 = vmatprep.subr.mxu0 0.0
    %267 = vmatpush1.msra.mxu0 0.0
    %268 = vmatprep.subr.mxu0 0.0
    %269 = vmatpush1.msra.mxu0 0.0
    %270 = vmatprep.subr.mxu0 0.0
    %271 = vmatpush1.msra.mxu0 0.0
    %272 = vmatprep.subr.mxu0 0.0
    %273 = vmatpush1.msra.mxu0 0.0
    %274 = vmatprep.subr.mxu0 0.0
    %275 = vmatpush1.msra.mxu0 0.0
    %276 = vmatprep.subr.mxu0 0.0
    %277 = vmatpush1.msra.mxu0 0.0
    %278 = vmatprep.subr.mxu0 0.0
    %279 = vmatpush1.msra.mxu0 0.0
    %280 = vmatprep.subr.mxu0 0.0
    %281 = vmatpush1.msra.mxu0 0.0
    %282 = vmatprep.subr.mxu0 0.0
    %283 = vmatpush1.msra.mxu0 0.0
    %284 = vmatprep.subr.mxu0 0.0
    %285 = vmatpush1.msra.mxu0 0.0
    %286 = vmatprep.subr.mxu0 0.0
    %287 = vmatpush1.msra.mxu0 0.0
    %288 = vmatprep.subr.mxu0 0.0
    %289 = vmatpush1.msra.mxu0 0.0
    %290 = vmatprep.subr.mxu0 0.0
    %291 = vmatpush1.msra.mxu0 0.0
    %292 = vmatprep.subr.mxu0 0.0
    %293 = vmatpush1.msra.mxu0 0.0
    %294 = vmatprep.subr.mxu0 0.0
    %295 = vmatpush1.msra.mxu0 0.0
    %296 = vmatprep.subr.mxu0 0.0
    %297 = vmatpush1.msra.mxu0 0.0
    %298 = vmatprep.subr.mxu0 0.0
    %299 = vmatpush1.msra.mxu0 0.0
    %300 = vmatprep.subr.mxu0 0.0
    %301 = vmatpush1.msra.mxu0 0.0
    %302 = vmatprep.subr.mxu0 0.0
    %303 = vmatpush1.msra.mxu0 0.0
    %304 = vmatprep.mubr.f32.mxu0 0.0
    %305 = vmatmul.mubr.f32.gmra.mrb[0].mxu0 %v234
    %v306 = vpop.f32.mrb[0].mxu0
    %v307 = vadd.f32 0.0, %v306
    %v308 = vpop.f32.mrb[0].mxu0
    %309 = vdwg.mxu0
    %v311 = vsel %vm232, %v56, 0
    %v313 = vsel %vm236, %v229, 0
    %315 = vmatprep.subr.mxu0 0.0
    %316 = vmatpush1.msra.mxu0 %v313
    %317 = vmatprep.subr.mxu0 0.0
    %318 = vmatpush1.msra.mxu0 0.0
    %319 = vmatprep.subr.mxu0 0.0
    %320 = vmatpush1.msra.mxu0 0.0
    %321 = vmatprep.subr.mxu0 0.0
    %322 = vmatpush1.msra.mxu0 0.0
    %323 = vmatprep.subr.mxu0 0.0
    %324 = vmatpush1.msra.mxu0 0.0
    %325 = vmatprep.subr.mxu0 0.0
    %326 = vmatpush1.msra.mxu0 0.0
    %327 = vmatprep.subr.mxu0 0.0
    %328 = vmatpush1.msra.mxu0 0.0
    %329 = vmatprep.subr.mxu0 0.0
    %330 = vmatpush1.msra.mxu0 0.0
    %331 = vmatprep.subr.mxu0 0.0
    %332 = vmatpush1.msra.mxu0 0.0
    %333 = vmatprep.subr.mxu0 0.0
    %334 = vmatpush1.msra.mxu0 0.0
    %335 = vmatprep.subr.mxu0 0.0
    %336 = vmatpush1.msra.mxu0 0.0
    %337 = vmatprep.subr.mxu0 0.0
    %338 = vmatpush1.msra.mxu0 0.0
    %339 = vmatprep.subr.mxu0 0.0
    %340 = vmatpush1.msra.mxu0 0.0
    %341 = vmatprep.subr.mxu0 0.0
    %342 = vmatpush1.msra.mxu0 0.0
    %343 = vmatprep.subr.mxu0 0.0
    %344 = vmatpush1.msra.mxu0 0.0
    %345 = vmatprep.subr.mxu0 0.0
    %346 = vmatpush1.msra.mxu0 0.0
    %347 = vmatprep.subr.mxu0 0.0
    %348 = vmatpush1.msra.mxu0 0.0
    %349 = vmatprep.subr.mxu0 0.0
    %350 = vmatpush1.msra.mxu0 0.0
    %351 = vmatprep.subr.mxu0 0.0
    %352 = vmatpush1.msra.mxu0 0.0
    %353 = vmatprep.subr.mxu0 0.0
    %354 = vmatpush1.msra.mxu0 0.0
    %355 = vmatprep.subr.mxu0 0.0
    %356 = vmatpush1.msra.mxu0 0.0
    %357 = vmatprep.subr.mxu0 0.0
    %358 = vmatpush1.msra.mxu0 0.0
    %359 = vmatprep.subr.mxu0 0.0
    %360 = vmatpush1.msra.mxu0 0.0
    %361 = vmatprep.subr.mxu0 0.0
    %362 = vmatpush1.msra.mxu0 0.0
    %363 = vmatprep.subr.mxu0 0.0
    %364 = vmatpush1.msra.mxu0 0.0
    %365 = vmatprep.subr.mxu0 0.0
    %366 = vmatpush1.msra.mxu0 0.0
    %367 = vmatprep.subr.mxu0 0.0
    %368 = vmatpush1.msra.mxu0 0.0
    %369 = vmatprep.subr.mxu0 0.0
    %370 = vmatpush1.msra.mxu0 0.0
    %371 = vmatprep.subr.mxu0 0.0
    %372 = vmatpush1.msra.mxu0 0.0
    %373 = vmatprep.subr.mxu0 0.0
    %374 = vmatpush1.msra.mxu0 0.0
    %375 = vmatprep.subr.mxu0 0.0
    %376 = vmatpush1.msra.mxu0 0.0
    %377 = vmatprep.subr.mxu0 0.0
    %378 = vmatpush1.msra.mxu0 0.0
    %379 = vmatprep.mubr.f32.mxu0 0.0
    %380 = vmatmul.mubr.f32.gmra.mrb[0].mxu0 %v311
    %v381 = vpop.f32.mrb[0].mxu0
    %v382 = vadd.f32 0.0, %v381
    %v383 = vpop.f32.mrb[0].mxu0
    %384 = vdwg.mxu0
    %v385 = vmul.f32 %v307, %v307
    %387 = vrot.lane.b32.xlu0 %v385, 124
    %v388 = vpop.permute.xlu0 %387
    %v390 = vadd.f32 %v385, %v388
    %v391 = vmul.f32 %v382, %v382
    %v392 = vadd.f32 %v390, %v391
    %v394 = vrot.slane %v391, 4
    %v396 = vadd.f32 %v392, %v394
    %vm397 = vcmask 27648
    %398 = vst.msk [vmem:[#allocation7] sm:$0xf] %vm397, %v396
    %s399 = scalar_lea.vmem [#allocation2], 48
    %v400 = vld [vmem:[%s399] sm:$0xff]
    %v401 = vld [vmem:[%s399 + $0x8] sm:$0xff]
    %v402 = vld [vmem:[%s399 + $0x10] sm:$0xff]
    %v403 = vld [vmem:[%s399 + $0x18] sm:$0xff]
    %v404 = vld [vmem:[%s399 + $0x20] sm:$0xff]
    %v405 = vld [vmem:[%s399 + $0x28] sm:$0xff]
    %s406 = scalar_lea.vmem [#allocation5], 48
    %v407 = vld [vmem:[%s406] sm:$0xff]
    %v408 = vld [vmem:[%s406 + $0x8] sm:$0xff]
    %v409 = vld [vmem:[%s406 + $0x10] sm:$0xff]
    %v410 = vld [vmem:[%s406 + $0x18] sm:$0xff]
    %v411 = vld [vmem:[%s406 + $0x20] sm:$0xff]
    %v412 = vld [vmem:[%s406 + $0x28] sm:$0xff]
    %v413 = vsub.f32 %v400, %v407
    %v414 = vsub.f32 %v401, %v408
    %v415 = vsub.f32 %v402, %v409
    %v416 = vsub.f32 %v403, %v410
    %v417 = vsub.f32 %v404, %v411
    %v418 = vsub.f32 %v405, %v412
    %v419 = vsel %vm75, %v413, 0.0
    %v420 = vsel %vm75, %v415, 0.0
    %v421 = vadd.f32 %v419, %v420
    %v422 = vsel %vm75, %v417, 0.0
    %v423 = vadd.f32 %v421, %v422
    %v424 = vsel %vm75, %v414, 0.0
    %v425 = vsel %vm75, %v416, 0.0
    %v426 = vadd.f32 %v424, %v425
    %v427 = vsel %vm75, %v418, 0.0
    %v428 = vadd.f32 %v426, %v427
    %429 = vmatprep.subr.mxu0 0.0
    %430 = vmatpush1.msra.mxu0 %v423
    %431 = vmatprep.subr.mxu0 0.0
    %432 = vmatpush1.msra.mxu0 %v428
    %433 = vmatprep.subr.mxu0 0.0
    %434 = vmatpush1.msra.mxu0 0.0
    %435 = vmatprep.subr.mxu0 0.0
    %436 = vmatpush1.msra.mxu0 0.0
    %437 = vmatprep.subr.mxu0 0.0
    %438 = vmatpush1.msra.mxu0 0.0
    %439 = vmatprep.subr.mxu0 0.0
    %440 = vmatpush1.msra.mxu0 0.0
    %441 = vmatprep.subr.mxu0 0.0
    %442 = vmatpush1.msra.mxu0 0.0
    %443 = vmatprep.subr.mxu0 0.0
    %444 = vmatpush1.msra.mxu0 0.0
    %445 = vmatprep.subr.mxu0 0.0
    %446 = vmatpush1.msra.mxu0 0.0
    %447 = vmatprep.subr.mxu0 0.0
    %448 = vmatpush1.msra.mxu0 0.0
    %449 = vmatprep.subr.mxu0 0.0
    %450 = vmatpush1.msra.mxu0 0.0
    %451 = vmatprep.subr.mxu0 0.0
    %452 = vmatpush1.msra.mxu0 0.0
    %453 = vmatprep.subr.mxu0 0.0
    %454 = vmatpush1.msra.mxu0 0.0
    %455 = vmatprep.subr.mxu0 0.0
    %456 = vmatpush1.msra.mxu0 0.0
    %457 = vmatprep.subr.mxu0 0.0
    %458 = vmatpush1.msra.mxu0 0.0
    %459 = vmatprep.subr.mxu0 0.0
    %460 = vmatpush1.msra.mxu0 0.0
    %461 = vmatprep.subr.mxu0 0.0
    %462 = vmatpush1.msra.mxu0 0.0
    %463 = vmatprep.subr.mxu0 0.0
    %464 = vmatpush1.msra.mxu0 0.0
    %465 = vmatprep.subr.mxu0 0.0
    %466 = vmatpush1.msra.mxu0 0.0
    %467 = vmatprep.subr.mxu0 0.0
    %468 = vmatpush1.msra.mxu0 0.0
    %469 = vmatprep.subr.mxu0 0.0
    %470 = vmatpush1.msra.mxu0 0.0
    %471 = vmatprep.subr.mxu0 0.0
    %472 = vmatpush1.msra.mxu0 0.0
    %473 = vmatprep.subr.mxu0 0.0
    %474 = vmatpush1.msra.mxu0 0.0
    %475 = vmatprep.subr.mxu0 0.0
    %476 = vmatpush1.msra.mxu0 0.0
    %477 = vmatprep.subr.mxu0 0.0
    %478 = vmatpush1.msra.mxu0 0.0
    %479 = vmatprep.subr.mxu0 0.0
    %480 = vmatpush1.msra.mxu0 0.0
    %481 = vmatprep.subr.mxu0 0.0
    %482 = vmatpush1.msra.mxu0 0.0
    %483 = vmatprep.subr.mxu0 0.0
    %484 = vmatpush1.msra.mxu0 0.0
    %485 = vmatprep.subr.mxu0 0.0
    %486 = vmatpush1.msra.mxu0 0.0
    %487 = vmatprep.subr.mxu0 0.0
    %488 = vmatpush1.msra.mxu0 0.0
    %489 = vmatprep.subr.mxu0 0.0
    %490 = vmatpush1.msra.mxu0 0.0
    %491 = vmatprep.subr.mxu0 0.0
    %492 = vmatpush1.msra.mxu0 0.0
    %493 = vmatprep.mubr.f32.mxu0 0.0
    %494 = vmatmul.mubr.f32.gmra.mrb[0].mxu0 %v87
    %v495 = vpop.f32.mrb[0].mxu0
    %v496 = vadd.f32 0.0, %v495
    %v497 = vpop.f32.mrb[0].mxu0
    %498 = vdwg.mxu0
    %v500 = vsel %vm75, %v496, 0
    %502 = vmatprep.subr.mxu0 0.0
    %503 = vmatpush1.msra.mxu0 %v53
    %504 = vmatprep.subr.mxu0 0.0
    %505 = vmatpush1.msra.mxu0 %v54
    %506 = vmatprep.subr.mxu0 0.0
    %507 = vmatpush1.msra.mxu0 0.0
    %508 = vmatprep.subr.mxu0 0.0
    %509 = vmatpush1.msra.mxu0 0.0
    %510 = vmatprep.subr.mxu0 0.0
    %511 = vmatpush1.msra.mxu0 0.0
    %512 = vmatprep.subr.mxu0 0.0
    %513 = vmatpush1.msra.mxu0 0.0
    %514 = vmatprep.subr.mxu0 0.0
    %515 = vmatpush1.msra.mxu0 0.0
    %516 = vmatprep.subr.mxu0 0.0
    %517 = vmatpush1.msra.mxu0 0.0
    %518 = vmatprep.subr.mxu0 0.0
    %519 = vmatpush1.msra.mxu0 0.0
    %520 = vmatprep.subr.mxu0 0.0
    %521 = vmatpush1.msra.mxu0 0.0
    %522 = vmatprep.subr.mxu0 0.0
    %523 = vmatpush1.msra.mxu0 0.0
    %524 = vmatprep.subr.mxu0 0.0
    %525 = vmatpush1.msra.mxu0 0.0
    %526 = vmatprep.subr.mxu0 0.0
    %527 = vmatpush1.msra.mxu0 0.0
    %528 = vmatprep.subr.mxu0 0.0
    %529 = vmatpush1.msra.mxu0 0.0
    %530 = vmatprep.subr.mxu0 0.0
    %531 = vmatpush1.msra.mxu0 0.0
    %532 = vmatprep.subr.mxu0 0.0
    %533 = vmatpush1.msra.mxu0 0.0
    %534 = vmatprep.subr.mxu0 0.0
    %535 = vmatpush1.msra.mxu0 0.0
    %536 = vmatprep.subr.mxu0 0.0
    %537 = vmatpush1.msra.mxu0 0.0
    %538 = vmatprep.subr.mxu0 0.0
    %539 = vmatpush1.msra.mxu0 0.0
    %540 = vmatprep.subr.mxu0 0.0
    %541 = vmatpush1.msra.mxu0 0.0
    %542 = vmatprep.subr.mxu0 0.0
    %543 = vmatpush1.msra.mxu0 0.0
    %544 = vmatprep.subr.mxu0 0.0
    %545 = vmatpush1.msra.mxu0 0.0
    %546 = vmatprep.subr.mxu0 0.0
    %547 = vmatpush1.msra.mxu0 0.0
    %548 = vmatprep.subr.mxu0 0.0
    %549 = vmatpush1.msra.mxu0 0.0
    %550 = vmatprep.subr.mxu0 0.0
    %551 = vmatpush1.msra.mxu0 0.0
    %552 = vmatprep.subr.mxu0 0.0
    %553 = vmatpush1.msra.mxu0 0.0
    %554 = vmatprep.subr.mxu0 0.0
    %555 = vmatpush1.msra.mxu0 0.0
    %556 = vmatprep.subr.mxu0 0.0
    %557 = vmatpush1.msra.mxu0 0.0
    %558 = vmatprep.subr.mxu0 0.0
    %559 = vmatpush1.msra.mxu0 0.0
    %560 = vmatprep.subr.mxu0 0.0
    %561 = vmatpush1.msra.mxu0 0.0
    %562 = vmatprep.subr.mxu0 0.0
    %563 = vmatpush1.msra.mxu0 0.0
    %564 = vmatprep.subr.mxu0 0.0
    %565 = vmatpush1.msra.mxu0 0.0
    %566 = vmatprep.mubr.f32.mxu0 0.0
    %567 = vmatmul.mubr.f32.gmra.mrb[0].mxu0 %v500
    %v568 = vpop.f32.mrb[0].mxu0
    %v569 = vadd.f32 0.0, %v568
    %v570 = vpop.f32.mrb[0].mxu0
    %571 = vdwg.mxu0
    %v573 = vsel %vm232, %v569, 0
    %575 = vmatprep.subr.mxu0 0.0
    %576 = vmatpush1.msra.mxu0 %v238
    %577 = vmatprep.subr.mxu0 0.0
    %578 = vmatpush1.msra.mxu0 0.0
    %579 = vmatprep.subr.mxu0 0.0
    %580 = vmatpush1.msra.mxu0 0.0
    %581 = vmatprep.subr.mxu0 0.0
    %582 = vmatpush1.msra.mxu0 0.0
    %583 = vmatprep.subr.mxu0 0.0
    %584 = vmatpush1.msra.mxu0 0.0
    %585 = vmatprep.subr.mxu0 0.0
    %586 = vmatpush1.msra.mxu0 0.0
    %587 = vmatprep.subr.mxu0 0.0
    %588 = vmatpush1.msra.mxu0 0.0
    %589 = vmatprep.subr.mxu0 0.0
    %590 = vmatpush1.msra.mxu0 0.0
    %591 = vmatprep.subr.mxu0 0.0
    %592 = vmatpush1.msra.mxu0 0.0
    %593 = vmatprep.subr.mxu0 0.0
    %594 = vmatpush1.msra.mxu0 0.0
    %595 = vmatprep.subr.mxu0 0.0
    %596 = vmatpush1.msra.mxu0 0.0
    %597 = vmatprep.subr.mxu0 0.0
    %598 = vmatpush1.msra.mxu0 0.0
    %599 = vmatprep.subr.mxu0 0.0
    %600 = vmatpush1.msra.mxu0 0.0
    %601 = vmatprep.subr.mxu0 0.0
    %602 = vmatpush1.msra.mxu0 0.0
    %603 = vmatprep.subr.mxu0 0.0
    %604 = vmatpush1.msra.mxu0 0.0
    %605 = vmatprep.subr.mxu0 0.0
    %606 = vmatpush1.msra.mxu0 0.0
    %607 = vmatprep.subr.mxu0 0.0
    %608 = vmatpush1.msra.mxu0 0.0
    %609 = vmatprep.subr.mxu0 0.0
    %610 = vmatpush1.msra.mxu0 0.0
    %611 = vmatprep.subr.mxu0 0.0
    %612 = vmatpush1.msra.mxu0 0.0
    %613 = vmatprep.subr.mxu0 0.0
    %614 = vmatpush1.msra.mxu0 0.0
    %615 = vmatprep.subr.mxu0 0.0
    %616 = vmatpush1.msra.mxu0 0.0
    %617 = vmatprep.subr.mxu0 0.0
    %618 = vmatpush1.msra.mxu0 0.0
    %619 = vmatprep.subr.mxu0 0.0
    %620 = vmatpush1.msra.mxu0 0.0
    %621 = vmatprep.subr.mxu0 0.0
    %622 = vmatpush1.msra.mxu0 0.0
    %623 = vmatprep.subr.mxu0 0.0
    %624 = vmatpush1.msra.mxu0 0.0
    %625 = vmatprep.subr.mxu0 0.0
    %626 = vmatpush1.msra.mxu0 0.0
    %627 = vmatprep.subr.mxu0 0.0
    %628 = vmatpush1.msra.mxu0 0.0
    %629 = vmatprep.subr.mxu0 0.0
    %630 = vmatpush1.msra.mxu0 0.0
    %631 = vmatprep.subr.mxu0 0.0
    %632 = vmatpush1.msra.mxu0 0.0
    %633 = vmatprep.subr.mxu0 0.0
    %634 = vmatpush1.msra.mxu0 0.0
    %635 = vmatprep.subr.mxu0 0.0
    %636 = vmatpush1.msra.mxu0 0.0
    %637 = vmatprep.subr.mxu0 0.0
    %638 = vmatpush1.msra.mxu0 0.0
    %639 = vmatprep.mubr.f32.mxu0 0.0
    %640 = vmatmul.mubr.f32.gmra.mrb[0].mxu0 %v573
    %v641 = vpop.f32.mrb[0].mxu0
    %v642 = vadd.f32 0.0, %v641
    %v643 = vpop.f32.mrb[0].mxu0
    %644 = vdwg.mxu0
    %v645 = vsel %vm236, %v569, 0
    %647 = vmatprep.subr.mxu0 0.0
    %648 = vmatpush1.msra.mxu0 %v645
    %649 = vmatprep.subr.mxu0 0.0
    %650 = vmatpush1.msra.mxu0 0.0
    %651 = vmatprep.subr.mxu0 0.0
    %652 = vmatpush1.msra.mxu0 0.0
    %653 = vmatprep.subr.mxu0 0.0
    %654 = vmatpush1.msra.mxu0 0.0
    %655 = vmatprep.subr.mxu0 0.0
    %656 = vmatpush1.msra.mxu0 0.0
    %657 = vmatprep.subr.mxu0 0.0
    %658 = vmatpush1.msra.mxu0 0.0
    %659 = vmatprep.subr.mxu0 0.0
    %660 = vmatpush1.msra.mxu0 0.0
    %661 = vmatprep.subr.mxu0 0.0
    %662 = vmatpush1.msra.mxu0 0.0
    %663 = vmatprep.subr.mxu0 0.0
    %664 = vmatpush1.msra.mxu0 0.0
    %665 = vmatprep.subr.mxu0 0.0
    %666 = vmatpush1.msra.mxu0 0.0
    %667 = vmatprep.subr.mxu0 0.0
    %668 = vmatpush1.msra.mxu0 0.0
    %669 = vmatprep.subr.mxu0 0.0
    %670 = vmatpush1.msra.mxu0 0.0
    %671 = vmatprep.subr.mxu0 0.0
    %672 = vmatpush1.msra.mxu0 0.0
    %673 = vmatprep.subr.mxu0 0.0
    %674 = vmatpush1.msra.mxu0 0.0
    %675 = vmatprep.subr.mxu0 0.0
    %676 = vmatpush1.msra.mxu0 0.0
    %677 = vmatprep.subr.mxu0 0.0
    %678 = vmatpush1.msra.mxu0 0.0
    %679 = vmatprep.subr.mxu0 0.0
    %680 = vmatpush1.msra.mxu0 0.0
    %681 = vmatprep.subr.mxu0 0.0
    %682 = vmatpush1.msra.mxu0 0.0
    %683 = vmatprep.subr.mxu0 0.0
    %684 = vmatpush1.msra.mxu0 0.0
    %685 = vmatprep.subr.mxu0 0.0
    %686 = vmatpush1.msra.mxu0 0.0
    %687 = vmatprep.subr.mxu0 0.0
    %688 = vmatpush1.msra.mxu0 0.0
    %689 = vmatprep.subr.mxu0 0.0
    %690 = vmatpush1.msra.mxu0 0.0
    %691 = vmatprep.subr.mxu0 0.0
    %692 = vmatpush1.msra.mxu0 0.0
    %693 = vmatprep.subr.mxu0 0.0
    %694 = vmatpush1.msra.mxu0 0.0
    %695 = vmatprep.subr.mxu0 0.0
    %696 = vmatpush1.msra.mxu0 0.0
    %697 = vmatprep.subr.mxu0 0.0
    %698 = vmatpush1.msra.mxu0 0.0
    %699 = vmatprep.subr.mxu0 0.0
    %700 = vmatpush1.msra.mxu0 0.0
    %701 = vmatprep.subr.mxu0 0.0
    %702 = vmatpush1.msra.mxu0 0.0
    %703 = vmatprep.subr.mxu0 0.0
    %704 = vmatpush1.msra.mxu0 0.0
    %705 = vmatprep.subr.mxu0 0.0
    %706 = vmatpush1.msra.mxu0 0.0
    %707 = vmatprep.subr.mxu0 0.0
    %708 = vmatpush1.msra.mxu0 0.0
    %709 = vmatprep.subr.mxu0 0.0
    %710 = vmatpush1.msra.mxu0 0.0
    %711 = vmatprep.mubr.f32.mxu0 0.0
    %712 = vmatmul.mubr.f32.gmra.mrb[0].mxu0 %v311
    %v713 = vpop.f32.mrb[0].mxu0
    %v714 = vadd.f32 0.0, %v713
    %v715 = vpop.f32.mrb[0].mxu0
    %716 = vdwg.mxu0
    %v717 = vmul.f32 %v642, %v642
    %719 = vrot.lane.b32.xlu0 %v717, 124
    %v720 = vpop.permute.xlu0 %719
    %v722 = vadd.f32 %v717, %v720
    %v723 = vmul.f32 %v714, %v714
    %v724 = vadd.f32 %v722, %v723
    %v726 = vrot.slane %v723, 4
    %v728 = vadd.f32 %v724, %v726
    %s729 = scalar_lea.vmem [#allocation7], 4
    %730 = vst.msk [vmem:[%s729] sm:$0xf] %vm397, %v728
    // Predicated region
    $region34: #{tpu_custom_call.1} parent=1 // pred_check
      _
    $region35: #{tpu_custom_call.1} parent=1 // pred_check_branch
      %732 = sbr.rel (0) target = $region37
    $region36: #{tpu_custom_call.1} parent=1 // pred_region
      %s734 = ssub.s32 128, 128
      %735 = vsyncadd [#allocation4], %s734
      %s736 = sshll.u32 [#allocation7], 4
      %s737 = int_to_ptr.vmem [resolvable:$true] %s736
      %742 = dma.vmem_to_hbm [thread:$0]  %s737, 128, %s6, [#allocation4], 64, 64, 4
    $region37: #{tpu_custom_call.1} parent=1 // pred_fallthru
      _
    // Predicated region
    $region38: #{tpu_custom_call.1} parent=1 // pred_check
      _
    $region39: #{tpu_custom_call.1} parent=1 // pred_check_branch
      %744 = sbr.rel (0) target = $region41
    $region40: #{tpu_custom_call.1} parent=1 // pred_region
      %745 = dma.done [#allocation4], 128
    $region41: #{tpu_custom_call.1} parent=1 // pred_fallthru
      _
    %746 = vsyncpa [#allocation3], 1
    %747 = vsyncpa [#allocation6], 1
    %748 = vsyncpa [#allocation4], 1

</llo_original>
